<compile_context>
chip_gen: v5e
topology: v5e:2x2
jax: 0.10.0
libtpu: 0.0.40
codegen_flags: <defaults>
</compile_context>

<pallas_src>
import functools

import jax
import jax.numpy as jnp
from jax import lax
from jax.experimental import pallas as pl
from jax.experimental.pallas import tpu as pltpu


# ------------------------------ Pallas kernel -------------------------------

def _spectral_mix_kernel(x_ref, w_ref, o_ref):
    """Complex mode mixing  out[b,o,l] = sum_i x[b,i,l] * w[o,i,l].

    x_ref: (2, B, Ci, L)   axis0 = {re, im}, L = 2*modes1*modes2 (both blocks)
    w_ref: (2, Co, Ci, L)
    o_ref: (2, B, Co, L)
    """
    xr = x_ref[0]                      # (B, Ci, L)
    xi = x_ref[1]
    wr = w_ref[0]                      # (Co, Ci, L)
    wi = w_ref[1]

    B = xr.shape[0]
    Co, Ci, L = wr.shape

    acc_r = jnp.zeros((B, Co, L), jnp.float32)
    acc_i = jnp.zeros((B, Co, L), jnp.float32)

    # Ci is a tiny static constant (2 for this module) -> unrolled VPU FMAs
    # with the mode axis lane-dense.  (For large Ci: batched dot_general/MXU.)
    for i in range(Ci):
        xri = xr[:, i, :][:, None, :]      # (B, 1, L)
        xii = xi[:, i, :][:, None, :]
        wri = wr[:, i, :][None, :, :]      # (1, Co, L)
        wii = wi[:, i, :][None, :, :]
        # 3-mult complex product: re = k1 - k3, im = k1 + k2
        k1 = wri * (xri + xii)
        k2 = xri * (wii - wri)
        k3 = xii * (wri + wii)
        acc_r = acc_r + (k1 - k3)
        acc_i = acc_i + (k1 + k2)

    o_ref[0] = acc_r
    o_ref[1] = acc_i


def spectral_mix(x_packed, w_packed):
    """x_packed: (2, B, Ci, L) f32, w_packed: (2, Co, Ci, L) f32 -> (2, B, Co, L)."""
    _, B, _, L = x_packed.shape
    _, Co, _, _ = w_packed.shape
    vspec = pl.BlockSpec(memory_space=pltpu.MemorySpace.VMEM)
    return pl.pallas_call(
        _spectral_mix_kernel,
        out_shape=jax.ShapeDtypeStruct((2, B, Co, L), jnp.float32),
        in_specs=[vspec, vspec],
        out_specs=vspec,
    )(x_packed, w_packed)


# ------------------------------ layer wrapper --------------------------------

def pack_spectral_weights(w1, w2):
    """torch layout (Ci, Co, m1, m2) complex -> kernel layout (2{re,im}, Co, Ci, 2*M)."""
    Ci, Co, m1, m2 = w1.shape
    M = m1 * m2

    def prep(w):
        return jnp.transpose(w, (1, 0, 2, 3)).reshape(Co, Ci, M)   # (Co, Ci, M)

    wc = jnp.concatenate([prep(w1), prep(w2)], axis=-1)            # (Co, Ci, 2M)
    return jnp.stack([jnp.real(wc), jnp.imag(wc)], axis=0).astype(jnp.float32)


def fourier_layer_forward(x, w_packed, *, modes1, modes2):
    """FourierLayer.forward: rfft2 -> truncated-mode complex mixing -> irfft2."""
    B, Ci, H, W = x.shape
    _, Co, Ci_w, L = w_packed.shape
    M = modes1 * modes2
    assert Ci_w == Ci and L == 2 * M
    assert H >= 2 * modes1 and (W // 2 + 1) >= modes2, "mode count too large for grid"

    # TODO(synk): no Pallas TPU FFT primitive; XLA FFT used here.
    x_ft = jnp.fft.rfft2(x)                                # (B, Ci, H, W//2+1) c64
    Wf = x_ft.shape[-1]

    x1 = x_ft[:, :, :modes1, :modes2].reshape(B, Ci, M)        # low-frequency rows
    x2 = x_ft[:, :, H - modes1:, :modes2].reshape(B, Ci, M)    # high-frequency rows
    xc = jnp.concatenate([x1, x2], axis=-1)                    # (B, Ci, 2M)
    x_packed = jnp.stack([jnp.real(xc), jnp.imag(xc)], axis=0).astype(jnp.float32)

    o = spectral_mix(x_packed, w_packed)                       # (2, B, Co, 2M)
    oc = lax.complex(o[0], o[1])                               # (B, Co, 2M)
    o1 = oc[:, :, :M].reshape(B, Co, modes1, modes2)
    o2 = oc[:, :, M:].reshape(B, Co, modes1, modes2)

    out_ft = jnp.zeros((B, Co, H, Wf), dtype=jnp.complex64)
    out_ft = out_ft.at[:, :, :modes1, :modes2].set(o1)
    out_ft = out_ft.at[:, :, H - modes1:, :modes2].set(o2)
    return jnp.fft.irfft2(out_ft, s=(H, W))


# ------------------------------ pure-JAX reference ---------------------------

def reference_forward(x, w1, w2, modes1, modes2):
    B, Ci, H, W = x.shape
    Co = w1.shape[1]
    x_ft = jnp.fft.rfft2(x)
    Wf = x_ft.shape[-1]

    def mix(xs, w):   # 'bixy,ioxy->boxy' via exact elementwise complex math
        return jnp.sum(xs[:, :, None] * w[None], axis=1)

    out_ft = jnp.zeros((B, Co, H, Wf), dtype=jnp.complex64)
    out_ft = out_ft.at[:, :, :modes1, :modes2].set(
        mix(x_ft[:, :, :modes1, :modes2], w1))
    out_ft = out_ft.at[:, :, H - modes1:, :modes2].set(
        mix(x_ft[:, :, H - modes1:, :modes2], w2))
    return jnp.fft.irfft2(out_ft, s=(H, W))


# ----------------------------------- main ------------------------------------

if __name__ == "__main__":
    batch = 2
    in_channels = 2
    out_channels = 2          # module requires in == out (zeros_like(out_ft))
    height = width = 32
    modes1 = modes2 = 8       # 2*modes1*modes2 = 128 -> one full lane row

    key = jax.random.PRNGKey(0)
    kx, k1r, k1i, k2r, k2i = jax.random.split(key, 5)
    x = jax.random.normal(kx, (batch, in_channels, height, width), jnp.float32)

    wshape = (in_channels, out_channels, modes1, modes2)
    scale = 1.0 / (in_channels * out_channels)
    w1 = scale * lax.complex(jax.random.normal(k1r, wshape, jnp.float32),
                             jax.random.normal(k1i, wshape, jnp.float32))
    w2 = scale * lax.complex(jax.random.normal(k2r, wshape, jnp.float32),
                             jax.random.normal(k2i, wshape, jnp.float32))

    w_packed = pack_spectral_weights(w1, w2)

    fwd = jax.jit(functools.partial(fourier_layer_forward,
                                    modes1=modes1, modes2=modes2))
    out = fwd(x, w_packed)
    jax.block_until_ready(out)

    assert out.shape == (batch, out_channels, height, width)
    assert out.dtype == jnp.float32

    ref = reference_forward(x, w1, w2, modes1, modes2)
    assert jnp.allclose(out, ref, rtol=1e-3, atol=1e-3), \
        float(jnp.max(jnp.abs(out - ref)))

    print("KERNEL_OK")
</pallas_src>

<mosaic_0001>
module attributes {stable_mosaic.version = 11 : i64} {
  func.func @_spectral_mix_kernel(%arg0: memref<2x2x2x128xf32, #tpu.memory_space<vmem>>, %arg1: memref<2x2x2x128xf32, #tpu.memory_space<vmem>>, %arg2: memref<2x2x2x128xf32, #tpu.memory_space<vmem>>) attributes {dimension_semantics = [], scalar_prefetch = 0 : i64, scratch_operands = 0 : i64, tpu.core_type = #tpu.core_type<tc>} {
    %c0 = arith.constant 0 : index
    %c0_0 = arith.constant 0 : index
    %c0_1 = arith.constant 0 : index
    %c0_2 = arith.constant 0 : index
    %0 = vector.load %arg0[%c0, %c0_0, %c0_1, %c0_2] : memref<2x2x2x128xf32, #tpu.memory_space<vmem>>, vector<1x2x2x128xf32>
    %1 = vector.shape_cast %0 : vector<1x2x2x128xf32> to vector<2x2x128xf32>
    %c1 = arith.constant 1 : index
    %c0_3 = arith.constant 0 : index
    %c0_4 = arith.constant 0 : index
    %c0_5 = arith.constant 0 : index
    %2 = vector.load %arg0[%c1, %c0_3, %c0_4, %c0_5] : memref<2x2x2x128xf32, #tpu.memory_space<vmem>>, vector<1x2x2x128xf32>
    %3 = vector.shape_cast %2 : vector<1x2x2x128xf32> to vector<2x2x128xf32>
    %c0_6 = arith.constant 0 : index
    %c0_7 = arith.constant 0 : index
    %c0_8 = arith.constant 0 : index
    %c0_9 = arith.constant 0 : index
    %4 = vector.load %arg1[%c0_6, %c0_7, %c0_8, %c0_9] : memref<2x2x2x128xf32, #tpu.memory_space<vmem>>, vector<1x2x2x128xf32>
    %5 = vector.shape_cast %4 : vector<1x2x2x128xf32> to vector<2x2x128xf32>
    %c1_10 = arith.constant 1 : index
    %c0_11 = arith.constant 0 : index
    %c0_12 = arith.constant 0 : index
    %c0_13 = arith.constant 0 : index
    %6 = vector.load %arg1[%c1_10, %c0_11, %c0_12, %c0_13] : memref<2x2x2x128xf32, #tpu.memory_space<vmem>>, vector<1x2x2x128xf32>
    %7 = vector.shape_cast %6 : vector<1x2x2x128xf32> to vector<2x2x128xf32>
    %cst = arith.constant 0.000000e+00 : f32
    %8 = vector.broadcast %cst : f32 to vector<2x2x128xf32>
    %cst_14 = arith.constant 0.000000e+00 : f32
    %9 = vector.broadcast %cst_14 : f32 to vector<2x2x128xf32>
    %10 = vector.extract_strided_slice %1 {offsets = [0, 0, 0], sizes = [2, 1, 128], strides = [1, 1, 1]} : vector<2x2x128xf32> to vector<2x1x128xf32>
    %11 = vector.shape_cast %10 : vector<2x1x128xf32> to vector<2x128xf32>
    %12 = vector.shape_cast %11 : vector<2x128xf32> to vector<2x1x128xf32>
    %13 = vector.extract_strided_slice %3 {offsets = [0, 0, 0], sizes = [2, 1, 128], strides = [1, 1, 1]} : vector<2x2x128xf32> to vector<2x1x128xf32>
    %14 = vector.shape_cast %13 : vector<2x1x128xf32> to vector<2x128xf32>
    %15 = vector.shape_cast %14 : vector<2x128xf32> to vector<2x1x128xf32>
    %16 = vector.extract_strided_slice %5 {offsets = [0, 0, 0], sizes = [2, 1, 128], strides = [1, 1, 1]} : vector<2x2x128xf32> to vector<2x1x128xf32>
    %17 = vector.shape_cast %16 : vector<2x1x128xf32> to vector<2x128xf32>
    %18 = vector.shape_cast %17 : vector<2x128xf32> to vector<1x2x128xf32>
    %19 = vector.extract_strided_slice %7 {offsets = [0, 0, 0], sizes = [2, 1, 128], strides = [1, 1, 1]} : vector<2x2x128xf32> to vector<2x1x128xf32>
    %20 = vector.shape_cast %19 : vector<2x1x128xf32> to vector<2x128xf32>
    %21 = vector.shape_cast %20 : vector<2x128xf32> to vector<1x2x128xf32>
    %22 = arith.addf %12, %15 : vector<2x1x128xf32>
    %23 = vector.broadcast %18 : vector<1x2x128xf32> to vector<2x2x128xf32>
    %24 = vector.broadcast %22 : vector<2x1x128xf32> to vector<2x2x128xf32>
    %25 = arith.mulf %23, %24 : vector<2x2x128xf32>
    %26 = arith.subf %21, %18 : vector<1x2x128xf32>
    %27 = vector.broadcast %12 : vector<2x1x128xf32> to vector<2x2x128xf32>
    %28 = vector.broadcast %26 : vector<1x2x128xf32> to vector<2x2x128xf32>
    %29 = arith.mulf %27, %28 : vector<2x2x128xf32>
    %30 = arith.addf %18, %21 : vector<1x2x128xf32>
    %31 = vector.broadcast %15 : vector<2x1x128xf32> to vector<2x2x128xf32>
    %32 = vector.broadcast %30 : vector<1x2x128xf32> to vector<2x2x128xf32>
    %33 = arith.mulf %31, %32 : vector<2x2x128xf32>
    %34 = arith.subf %25, %33 : vector<2x2x128xf32>
    %35 = arith.addf %8, %34 : vector<2x2x128xf32>
    %36 = arith.addf %25, %29 : vector<2x2x128xf32>
    %37 = arith.addf %9, %36 : vector<2x2x128xf32>
    %38 = vector.extract_strided_slice %1 {offsets = [0, 1, 0], sizes = [2, 1, 128], strides = [1, 1, 1]} : vector<2x2x128xf32> to vector<2x1x128xf32>
    %39 = vector.shape_cast %38 : vector<2x1x128xf32> to vector<2x128xf32>
    %40 = vector.shape_cast %39 : vector<2x128xf32> to vector<2x1x128xf32>
    %41 = vector.extract_strided_slice %3 {offsets = [0, 1, 0], sizes = [2, 1, 128], strides = [1, 1, 1]} : vector<2x2x128xf32> to vector<2x1x128xf32>
    %42 = vector.shape_cast %41 : vector<2x1x128xf32> to vector<2x128xf32>
    %43 = vector.shape_cast %42 : vector<2x128xf32> to vector<2x1x128xf32>
    %44 = vector.extract_strided_slice %5 {offsets = [0, 1, 0], sizes = [2, 1, 128], strides = [1, 1, 1]} : vector<2x2x128xf32> to vector<2x1x128xf32>
    %45 = vector.shape_cast %44 : vector<2x1x128xf32> to vector<2x128xf32>
    %46 = vector.shape_cast %45 : vector<2x128xf32> to vector<1x2x128xf32>
    %47 = vector.extract_strided_slice %7 {offsets = [0, 1, 0], sizes = [2, 1, 128], strides = [1, 1, 1]} : vector<2x2x128xf32> to vector<2x1x128xf32>
    %48 = vector.shape_cast %47 : vector<2x1x128xf32> to vector<2x128xf32>
    %49 = vector.shape_cast %48 : vector<2x128xf32> to vector<1x2x128xf32>
    %50 = arith.addf %40, %43 : vector<2x1x128xf32>
    %51 = vector.broadcast %46 : vector<1x2x128xf32> to vector<2x2x128xf32>
    %52 = vector.broadcast %50 : vector<2x1x128xf32> to vector<2x2x128xf32>
    %53 = arith.mulf %51, %52 : vector<2x2x128xf32>
    %54 = arith.subf %49, %46 : vector<1x2x128xf32>
    %55 = vector.broadcast %40 : vector<2x1x128xf32> to vector<2x2x128xf32>
    %56 = vector.broadcast %54 : vector<1x2x128xf32> to vector<2x2x128xf32>
    %57 = arith.mulf %55, %56 : vector<2x2x128xf32>
    %58 = arith.addf %46, %49 : vector<1x2x128xf32>
    %59 = vector.broadcast %43 : vector<2x1x128xf32> to vector<2x2x128xf32>
    %60 = vector.broadcast %58 : vector<1x2x128xf32> to vector<2x2x128xf32>
    %61 = arith.mulf %59, %60 : vector<2x2x128xf32>
    %62 = arith.subf %53, %61 : vector<2x2x128xf32>
    %63 = arith.addf %35, %62 : vector<2x2x128xf32>
    %64 = arith.addf %53, %57 : vector<2x2x128xf32>
    %65 = arith.addf %37, %64 : vector<2x2x128xf32>
    %c0_15 = arith.constant 0 : index
    %c0_16 = arith.constant 0 : index
    %c0_17 = arith.constant 0 : index
    %c0_18 = arith.constant 0 : index
    %66 = vector.load %arg2[%c0_15, %c0_16, %c0_17, %c0_18] : memref<2x2x2x128xf32, #tpu.memory_space<vmem>>, vector<1x2x2x128xf32>
    %67 = vector.shape_cast %66 : vector<1x2x2x128xf32> to vector<2x2x128xf32>
    %68 = vector.shape_cast %63 : vector<2x2x128xf32> to vector<1x2x2x128xf32>
    tpu.vector_store %arg2[%c0_15, %c0_16, %c0_17, %c0_18], %68 {strides = array<i32>} : memref<2x2x2x128xf32, #tpu.memory_space<vmem>>, vector<1x2x2x128xf32>,
    %c1_19 = arith.constant 1 : index
    %c0_20 = arith.constant 0 : index
    %c0_21 = arith.constant 0 : index
    %c0_22 = arith.constant 0 : index
    %69 = vector.load %arg2[%c1_19, %c0_20, %c0_21, %c0_22] : memref<2x2x2x128xf32, #tpu.memory_space<vmem>>, vector<1x2x2x128xf32>
    %70 = vector.shape_cast %69 : vector<1x2x2x128xf32> to vector<2x2x128xf32>
    %71 = vector.shape_cast %65 : vector<2x2x128xf32> to vector<1x2x2x128xf32>
    tpu.vector_store %arg2[%c1_19, %c0_20, %c0_21, %c0_22], %71 {strides = array<i32>} : memref<2x2x2x128xf32, #tpu.memory_space<vmem>>, vector<1x2x2x128xf32>,
    return
  }
}

</mosaic_0001>

<llo_original>
// kernel: reverse.1
$region0: #{reverse.1}
  %s0 = inlined_call_operand.vmem [shape: f32[2,2,32,15], index: 0, kind: input, shape index: {}]
  %s1 = inlined_call_operand.vmem [shape: f32[2,2,32,15], index: 1, kind: output, shape index: {}]
  $region1: #{reverse.1} parent=0
    #allocation0 [shape = 'u8[49152]{0}', space=vmem, size = 0xc000, scoped, tag = 'operand span for operand 0']
    #allocation1 [shape = 'u8[32768]{0}', space=vmem, size = 0x8000, scoped, tag = 'operand span for operand 1']
    %s2 = scalar_lea.vmem [#allocation0], 8
    // Predicated region
    $region2: #{reverse.1} parent=1 // pred_check
      _
    $region3: #{reverse.1} parent=1 // pred_check_branch
      %4 = sbr.rel (0) target = $region5
    $region4: #{reverse.1} parent=1 // pred_region
      // Predicated region
      $region6: #{reverse.1} parent=4 // pred_check
        _
      $region7: #{reverse.1} parent=4 // pred_check_branch
        %6 = sbr.rel (0) target = $region9
      $region8: #{reverse.1} parent=4 // pred_region
        // Predicated region
        $region21: #{reverse.1} parent=8 // pred_check
          _
        $region22: #{reverse.1} parent=8 // pred_check_branch
          %36 = sbr.rel (0) target = $region24
        $region23: #{reverse.1} parent=8 // pred_region
          loop: start=0, step=1, limit=1
          $region25: #{reverse.1} parent=23 // loop_pre_header
            _
          $region26: #{reverse.1} parent=23 // loop_header
            %s38 = sphi 0, %s42
            %p39 = scmp.ge.s32.totalorder %s38, 1
            %s43 = sphi %s0, %s0
            %s44 = sphi %s2, %s2
          $region27: #{reverse.1} parent=23 // loop_header_branch
            %41 = sbr.rel (%p39) target = $region31
          $region28: #{reverse.1} parent=23 // loop_body
            %v45 = vld [vmem:[%s43] sm:$0xff]
            %46 = vst [vmem:[%s44] sm:$0xff] %v45
            %v47 = vld [vmem:[%s43 + $0x8] sm:$0xff]
            %48 = vst [vmem:[%s44 + $0x8] sm:$0xff] %v47
            %v49 = vld [vmem:[%s43 + $0x10] sm:$0xff]
            %50 = vst [vmem:[%s44 + $0x18] sm:$0xff] %v49
            %v51 = vld [vmem:[%s43 + $0x18] sm:$0xff]
            %52 = vst [vmem:[%s44 + $0x20] sm:$0xff] %v51
            %v53 = vld [vmem:[%s43 + $0x20] sm:$0xff]
            %54 = vst [vmem:[%s44 + $0x30] sm:$0xff] %v53
            %v55 = vld [vmem:[%s43 + $0x28] sm:$0xff]
            %56 = vst [vmem:[%s44 + $0x38] sm:$0xff] %v55
            %v57 = vld [vmem:[%s43 + $0x30] sm:$0xff]
            %58 = vst [vmem:[%s44 + $0x48] sm:$0xff] %v57
            %v59 = vld [vmem:[%s43 + $0x38] sm:$0xff]
            %60 = vst [vmem:[%s44 + $0x50] sm:$0xff] %v59
          $region29: #{reverse.1} parent=23 // loop_footer
            %s42 = sadd.s32 1, %s38
          $region30: #{reverse.1} parent=23 // loop_footer_branch
            %37 = sbr.rel target = $region26
          $region31: #{reverse.1} parent=23 // loop_exit
            _
        $region24: #{reverse.1} parent=8 // pred_fallthru
          _
        // Predicated region
        $region32: #{reverse.1} parent=8 // pred_check
          _
        $region33: #{reverse.1} parent=8 // pred_check_branch
          %62 = sbr.rel target = $region35
        $region34: #{reverse.1} parent=8 // pred_region
          _
        $region35: #{reverse.1} parent=8 // pred_fallthru
          _
      $region9: #{reverse.1} parent=4 // pred_fallthru
        _
      // Predicated region
      $region10: #{reverse.1} parent=4 // pred_check
        _
      $region11: #{reverse.1} parent=4 // pred_check_branch
        %8 = sbr.rel target = $region13
      $region12: #{reverse.1} parent=4 // pred_region
        %s10 = ssub.s32 256, 1
        loop: start=0, step=1, limit=1
        $region14: #{reverse.1} parent=12 // loop_pre_header
          _
        $region15: #{reverse.1} parent=12 // loop_header
          %s12 = sphi 0, %s16
          %p13 = scmp.ge.s32.totalorder %s12, 1
          %s17 = sphi %s0, %s0
          %s18 = sphi %s2, %s2
        $region16: #{reverse.1} parent=12 // loop_header_branch
          %15 = sbr.rel (%p13) target = $region20
        $region17: #{reverse.1} parent=12 // loop_body
          %v19 = vld [vmem:[%s17] sm:%s10]
          %20 = vst [vmem:[%s18] sm:%s10] %v19
          %v21 = vld [vmem:[%s17 + $0x8] sm:%s10]
          %22 = vst [vmem:[%s18 + $0x8] sm:%s10] %v21
          %v23 = vld [vmem:[%s17 + $0x10] sm:%s10]
          %24 = vst [vmem:[%s18 + $0x18] sm:%s10] %v23
          %v25 = vld [vmem:[%s17 + $0x18] sm:%s10]
          %26 = vst [vmem:[%s18 + $0x20] sm:%s10] %v25
          %v27 = vld [vmem:[%s17 + $0x20] sm:%s10]
          %28 = vst [vmem:[%s18 + $0x30] sm:%s10] %v27
          %v29 = vld [vmem:[%s17 + $0x28] sm:%s10]
          %30 = vst [vmem:[%s18 + $0x38] sm:%s10] %v29
          %v31 = vld [vmem:[%s17 + $0x30] sm:%s10]
          %32 = vst [vmem:[%s18 + $0x48] sm:%s10] %v31
          %v33 = vld [vmem:[%s17 + $0x38] sm:%s10]
          %34 = vst [vmem:[%s18 + $0x50] sm:%s10] %v33
        $region18: #{reverse.1} parent=12 // loop_footer
          %s16 = sadd.s32 1, %s12
        $region19: #{reverse.1} parent=12 // loop_footer_branch
          %11 = sbr.rel target = $region15
        $region20: #{reverse.1} parent=12 // loop_exit
          _
      $region13: #{reverse.1} parent=4 // pred_fallthru
        _
    $region5: #{reverse.1} parent=1 // pred_fallthru
      _
    %63 = vnop
    %s64 = scalar_lea.vmem [#allocation0], 8
    %s65 = scalar_lea.vmem %s64, 7 [#allocation0]
    %v66 = vld [vmem:[%s65] ss:$-1 sm:$0xff]
    %v67 = vrot.slane %v66, 1
    %68 = vst [vmem:[#allocation1] sm:$0xff] %v67
    %s69 = scalar_lea.vmem [#allocation0], 16
    %s70 = scalar_lea.vmem %s69, 7 [#allocation0]
    %v71 = vld [vmem:[%s70] ss:$-1 sm:$0xff]
    %v72 = vrot.slane %v71, 1
    %v73 = vlaneseq
    %v74 = vshrl.u32 %v73, 7
    %vm75 = vcmp.lt.s32.totalorder %v74, 7
    %76 = vst.msk [vmem:[#allocation1] sm:$0xff] %vm75, %v72
    %s77 = scalar_lea.vmem [#allocation1], 8
    %s78 = scalar_lea.vmem [#allocation0], 7
    %v79 = vld [vmem:[%s78] ss:$-1 sm:$0xff]
    %v80 = vrot.slane %v79, 1
    %81 = vst [vmem:[%s77] sm:$0xff] %v80
    %s82 = scalar_lea.vmem [#allocation0], 8
    %s83 = scalar_lea.vmem %s82, 7 [#allocation0]
    %v84 = vld [vmem:[%s83] ss:$-1 sm:$0xff]
    %v85 = vrot.slane %v84, 1
    %v86 = vlaneseq
    %v87 = vshrl.u32 %v86, 7
    %vm88 = vcmp.lt.s32.totalorder %v87, 7
    %89 = vst.msk [vmem:[%s77] sm:$0xff] %vm88, %v85
    %s90 = scalar_lea.vmem [#allocation1], 16
    %s91 = scalar_lea.vmem [#allocation0], 24
    %s92 = scalar_lea.vmem %s91, 8 [#allocation0]
    %s93 = scalar_lea.vmem %s92, 7 [#allocation0]
    %v94 = vld [vmem:[%s93] ss:$-1 sm:$0xff]
    %v95 = vrot.slane %v94, 1
    %96 = vst [vmem:[%s90] sm:$0xff] %v95
    %s97 = scalar_lea.vmem %s91, 16 [#allocation0]
    %s98 = scalar_lea.vmem %s97, 7 [#allocation0]
    %v99 = vld [vmem:[%s98] ss:$-1 sm:$0xff]
    %v100 = vrot.slane %v99, 1
    %v101 = vlaneseq
    %v102 = vshrl.u32 %v101, 7
    %vm103 = vcmp.lt.s32.totalorder %v102, 7
    %104 = vst.msk [vmem:[%s90] sm:$0xff] %vm103, %v100
    %s105 = scalar_lea.vmem %s90, 8 [#allocation1]
    %s106 = scalar_lea.vmem %s91, 7 [#allocation0]
    %v107 = vld [vmem:[%s106] ss:$-1 sm:$0xff]
    %v108 = vrot.slane %v107, 1
    %109 = vst [vmem:[%s105] sm:$0xff] %v108
    %s110 = scalar_lea.vmem %s91, 8 [#allocation0]
    %s111 = scalar_lea.vmem %s110, 7 [#allocation0]
    %v112 = vld [vmem:[%s111] ss:$-1 sm:$0xff]
    %v113 = vrot.slane %v112, 1
    %v114 = vlaneseq
    %v115 = vshrl.u32 %v114, 7
    %vm116 = vcmp.lt.s32.totalorder %v115, 7
    %117 = vst.msk [vmem:[%s105] sm:$0xff] %vm116, %v113
    %s118 = scalar_lea.vmem [#allocation1], 32
    %s119 = scalar_lea.vmem [#allocation0], 48
    %s120 = scalar_lea.vmem %s119, 8 [#allocation0]
    %s121 = scalar_lea.vmem %s120, 7 [#allocation0]
    %v122 = vld [vmem:[%s121] ss:$-1 sm:$0xff]
    %v123 = vrot.slane %v122, 1
    %124 = vst [vmem:[%s118] sm:$0xff] %v123
    %s125 = scalar_lea.vmem %s119, 16 [#allocation0]
    %s126 = scalar_lea.vmem %s125, 7 [#allocation0]
    %v127 = vld [vmem:[%s126] ss:$-1 sm:$0xff]
    %v128 = vrot.slane %v127, 1
    %v129 = vlaneseq
    %v130 = vshrl.u32 %v129, 7
    %vm131 = vcmp.lt.s32.totalorder %v130, 7
    %132 = vst.msk [vmem:[%s118] sm:$0xff] %vm131, %v128
    %s133 = scalar_lea.vmem %s118, 8 [#allocation1]
    %s134 = scalar_lea.vmem %s119, 7 [#allocation0]
    %v135 = vld [vmem:[%s134] ss:$-1 sm:$0xff]
    %v136 = vrot.slane %v135, 1
    %137 = vst [vmem:[%s133] sm:$0xff] %v136
    %s138 = scalar_lea.vmem %s119, 8 [#allocation0]
    %s139 = scalar_lea.vmem %s138, 7 [#allocation0]
    %v140 = vld [vmem:[%s139] ss:$-1 sm:$0xff]
    %v141 = vrot.slane %v140, 1
    %v142 = vlaneseq
    %v143 = vshrl.u32 %v142, 7
    %vm144 = vcmp.lt.s32.totalorder %v143, 7
    %145 = vst.msk [vmem:[%s133] sm:$0xff] %vm144, %v141
    %s146 = scalar_lea.vmem [#allocation1], 48
    %s147 = scalar_lea.vmem [#allocation0], 72
    %s148 = scalar_lea.vmem %s147, 8 [#allocation0]
    %s149 = scalar_lea.vmem %s148, 7 [#allocation0]
    %v150 = vld [vmem:[%s149] ss:$-1 sm:$0xff]
    %v151 = vrot.slane %v150, 1
    %152 = vst [vmem:[%s146] sm:$0xff] %v151
    %s153 = scalar_lea.vmem %s147, 16 [#allocation0]
    %s154 = scalar_lea.vmem %s153, 7 [#allocation0]
    %v155 = vld [vmem:[%s154] ss:$-1 sm:$0xff]
    %v156 = vrot.slane %v155, 1
    %v157 = vlaneseq
    %v158 = vshrl.u32 %v157, 7
    %vm159 = vcmp.lt.s32.totalorder %v158, 7
    %160 = vst.msk [vmem:[%s146] sm:$0xff] %vm159, %v156
    %s161 = scalar_lea.vmem %s146, 8 [#allocation1]
    %s162 = scalar_lea.vmem %s147, 7 [#allocation0]
    %v163 = vld [vmem:[%s162] ss:$-1 sm:$0xff]
    %v164 = vrot.slane %v163, 1
    %165 = vst [vmem:[%s161] sm:$0xff] %v164
    %s166 = scalar_lea.vmem %s147, 8 [#allocation0]
    %s167 = scalar_lea.vmem %s166, 7 [#allocation0]
    %v168 = vld [vmem:[%s167] ss:$-1 sm:$0xff]
    %v169 = vrot.slane %v168, 1
    %v170 = vlaneseq
    %v171 = vshrl.u32 %v170, 7
    %vm172 = vcmp.lt.s32.totalorder %v171, 7
    %173 = vst.msk [vmem:[%s161] sm:$0xff] %vm172, %v169
    // Predicated region
    $region36: #{reverse.1} parent=1 // pred_check
      _
    $region37: #{reverse.1} parent=1 // pred_check_branch
      %175 = sbr.rel (0) target = $region39
    $region38: #{reverse.1} parent=1 // pred_region
      // Predicated region
      $region40: #{reverse.1} parent=38 // pred_check
        _
      $region41: #{reverse.1} parent=38 // pred_check_branch
        %177 = sbr.rel (0) target = $region43
      $region42: #{reverse.1} parent=38 // pred_region
        // Predicated region
        $region55: #{reverse.1} parent=42 // pred_check
          _
        $region56: #{reverse.1} parent=42 // pred_check_branch
          %207 = sbr.rel (0) target = $region58
        $region57: #{reverse.1} parent=42 // pred_region
          loop: start=0, step=1, limit=1
          $region59: #{reverse.1} parent=57 // loop_pre_header
            _
          $region60: #{reverse.1} parent=57 // loop_header
            %s209 = sphi 0, %s213
            %p210 = scmp.ge.s32.totalorder %s209, 1
            %s214 = sphi [#allocation1], [#allocation1]
            %s215 = sphi %s1, %s1
          $region61: #{reverse.1} parent=57 // loop_header_branch
            %212 = sbr.rel (%p210) target = $region65
          $region62: #{reverse.1} parent=57 // loop_body
            %v216 = vld [vmem:[%s214] sm:$0xff]
            %217 = vst [vmem:[%s215] sm:$0xff] %v216
            %v218 = vld [vmem:[%s214 + $0x8] sm:$0xff]
            %219 = vst [vmem:[%s215 + $0x8] sm:$0xff] %v218
            %v220 = vld [vmem:[%s214 + $0x10] sm:$0xff]
            %221 = vst [vmem:[%s215 + $0x10] sm:$0xff] %v220
            %v222 = vld [vmem:[%s214 + $0x18] sm:$0xff]
            %223 = vst [vmem:[%s215 + $0x18] sm:$0xff] %v222
            %v224 = vld [vmem:[%s214 + $0x20] sm:$0xff]
            %225 = vst [vmem:[%s215 + $0x20] sm:$0xff] %v224
            %v226 = vld [vmem:[%s214 + $0x28] sm:$0xff]
            %227 = vst [vmem:[%s215 + $0x28] sm:$0xff] %v226
            %v228 = vld [vmem:[%s214 + $0x30] sm:$0xff]
            %229 = vst [vmem:[%s215 + $0x30] sm:$0xff] %v228
            %v230 = vld [vmem:[%s214 + $0x38] sm:$0xff]
            %231 = vst [vmem:[%s215 + $0x38] sm:$0xff] %v230
          $region63: #{reverse.1} parent=57 // loop_footer
            %s213 = sadd.s32 1, %s209
          $region64: #{reverse.1} parent=57 // loop_footer_branch
            %208 = sbr.rel target = $region60
          $region65: #{reverse.1} parent=57 // loop_exit
            _
        $region58: #{reverse.1} parent=42 // pred_fallthru
          _
        // Predicated region
        $region66: #{reverse.1} parent=42 // pred_check
          _
        $region67: #{reverse.1} parent=42 // pred_check_branch
          %233 = sbr.rel target = $region69
        $region68: #{reverse.1} parent=42 // pred_region
          _
        $region69: #{reverse.1} parent=42 // pred_fallthru
          _
      $region43: #{reverse.1} parent=38 // pred_fallthru
        _
      // Predicated region
      $region44: #{reverse.1} parent=38 // pred_check
        _
      $region45: #{reverse.1} parent=38 // pred_check_branch
        %179 = sbr.rel target = $region47
      $region46: #{reverse.1} parent=38 // pred_region
        %s181 = ssub.s32 256, 1
        loop: start=0, step=1, limit=1
        $region48: #{reverse.1} parent=46 // loop_pre_header
          _
        $region49: #{reverse.1} parent=46 // loop_header
          %s183 = sphi 0, %s187
          %p184 = scmp.ge.s32.totalorder %s183, 1
          %s188 = sphi [#allocation1], [#allocation1]
          %s189 = sphi %s1, %s1
        $region50: #{reverse.1} parent=46 // loop_header_branch
          %186 = sbr.rel (%p184) target = $region54
        $region51: #{reverse.1} parent=46 // loop_body
          %v190 = vld [vmem:[%s188] sm:%s181]
          %191 = vst [vmem:[%s189] sm:%s181] %v190
          %v192 = vld [vmem:[%s188 + $0x8] sm:%s181]
          %193 = vst [vmem:[%s189 + $0x8] sm:%s181] %v192
          %v194 = vld [vmem:[%s188 + $0x10] sm:%s181]
          %195 = vst [vmem:[%s189 + $0x10] sm:%s181] %v194
          %v196 = vld [vmem:[%s188 + $0x18] sm:%s181]
          %197 = vst [vmem:[%s189 + $0x18] sm:%s181] %v196
          %v198 = vld [vmem:[%s188 + $0x20] sm:%s181]
          %199 = vst [vmem:[%s189 + $0x20] sm:%s181] %v198
          %v200 = vld [vmem:[%s188 + $0x28] sm:%s181]
          %201 = vst [vmem:[%s189 + $0x28] sm:%s181] %v200
          %v202 = vld [vmem:[%s188 + $0x30] sm:%s181]
          %203 = vst [vmem:[%s189 + $0x30] sm:%s181] %v202
          %v204 = vld [vmem:[%s188 + $0x38] sm:%s181]
          %205 = vst [vmem:[%s189 + $0x38] sm:%s181] %v204
        $region52: #{reverse.1} parent=46 // loop_footer
          %s187 = sadd.s32 1, %s183
        $region53: #{reverse.1} parent=46 // loop_footer_branch
          %182 = sbr.rel target = $region49
        $region54: #{reverse.1} parent=46 // loop_exit
          _
      $region47: #{reverse.1} parent=38 // pred_fallthru
        _
    $region39: #{reverse.1} parent=1 // pred_fallthru
      _
    %234 = vnop

// kernel: fourier_layer_forward.1
$region0: #{fourier_layer_forward.1}
  #allocation0 [shape = 'u32[]', space=smem, size = 0x4, offset = 0x4, fixed_abs, tag = 'smem constant byte address 0x4 - core index']
  #allocation1 [shape = 'u32[72,128]{1,0:T(1,128)}', space=vmem, size = 0x9000, scoped, tag = 'internal scratch']
  %s0 = inlined_call_operand.vmem [shape: f32[2,2,2,128], index: 0, kind: input, shape index: {}]
  %s1 = inlined_call_operand.vmem [shape: f32[2,2,2,128], index: 1, kind: input, shape index: {}]
  %s2 = inlined_call_operand.vmem [shape: f32[2,2,2,128], index: 2, kind: output, shape index: {}]
  %s3 = sld [smem:[#allocation0]]
  $region18: #{fourier_layer_forward.1} parent=0
    _
  %s5 = ssub.s32 1, %s3
  %s6 = scalar_select 0, %s5, %s3
  // Predicated region
  $region2: #{fourier_layer_forward.1} parent=0 // pred_check
    _
  $region3: #{fourier_layer_forward.1} parent=0 // pred_check_branch
    %8 = sbr.rel (0) target = $region5
  $region4: #{fourier_layer_forward.1} parent=0 // pred_region
    _
  $region5: #{fourier_layer_forward.1} parent=0 // pred_fallthru
    _
  // Predicated region
  $region6: #{fourier_layer_forward.1} parent=0 // pred_check
    _
  $region7: #{fourier_layer_forward.1} parent=0 // pred_check_branch
    %10 = sbr.rel (0) target = $region9
  $region8: #{fourier_layer_forward.1} parent=0 // pred_region
    _
  $region9: #{fourier_layer_forward.1} parent=0 // pred_fallthru
    _
  %v11 = vld [vmem:[%s0] sm:$0x3]
  %v12 = vld [vmem:[%s0 + $0x2] sm:$0x3]
  %s13 = scalar_lea.vmem %s0, 4
  %v14 = vld [vmem:[%s13] sm:$0x3]
  %v15 = vld [vmem:[%s13 + $0x2] sm:$0x3]
  %v16 = vld [vmem:[%s1] sm:$0x3]
  %v17 = vld [vmem:[%s1 + $0x2] sm:$0x3]
  %s18 = scalar_lea.vmem %s1, 4
  %v19 = vld [vmem:[%s18] sm:$0x3]
  %v20 = vld [vmem:[%s18 + $0x2] sm:$0x3]
  %v21 = vadd.f32 %v11, %v14
  %v22 = vadd.f32 %v12, %v15
  %v23 = vperm.slane %v21, 0
  %v24 = vperm.slane %v22, 0
  %v25 = vmul.f32 %v16, %v23
  %v26 = vmul.f32 %v17, %v23
  %v27 = vmul.f32 %v16, %v24
  %v28 = vmul.f32 %v17, %v24
  %v29 = vsub.f32 %v19, %v16
  %v30 = vsub.f32 %v20, %v17
  %v31 = vperm.slane %v11, 0
  %v32 = vperm.slane %v12, 0
  %v35 = vrot.slane %v30, 7
  %vm36 = vcmask 1041409
  %v37 = vsel %vm36, %v35, %v29
  %v39 = vmul.f32 %v31, %v37
  %v40 = vmul.f32 %v32, %v37
  %v41 = vadd.f32 %v16, %v19
  %v42 = vadd.f32 %v17, %v20
  %v43 = vperm.slane %v14, 0
  %v44 = vperm.slane %v15, 0
  %v47 = vrot.slane %v42, 7
  %v48 = vsel %vm36, %v47, %v41
  %v50 = vmul.f32 %v43, %v48
  %v51 = vmul.f32 %v44, %v48
  %v54 = vrot.slane %v50, 1
  %v55 = vrot.slane %v51, 1
  %v60 = vsub.f32 %v25, %v50
  %v61 = vsub.f32 %v26, %v54
  %v62 = vsub.f32 %v27, %v51
  %v63 = vsub.f32 %v28, %v55
  %v64 = vadd.f32 %v60, 0.0
  %v65 = vadd.f32 %v61, 0.0
  %v66 = vadd.f32 %v62, 0.0
  %v67 = vadd.f32 %v63, 0.0
  %v70 = vrot.slane %v39, 1
  %v71 = vrot.slane %v40, 1
  %v76 = vadd.f32 %v25, %v39
  %v77 = vadd.f32 %v26, %v70
  %v78 = vadd.f32 %v27, %v40
  %v79 = vadd.f32 %v28, %v71
  %v80 = vadd.f32 %v76, 0.0
  %v81 = vadd.f32 %v77, 0.0
  %v82 = vadd.f32 %v78, 0.0
  %v83 = vadd.f32 %v79, 0.0
  %v84 = vperm.slane %v21, 1
  %v85 = vperm.slane %v22, 1
  %v86 = vmul.f32 %v16, %v84
  %v87 = vmul.f32 %v17, %v84
  %v88 = vmul.f32 %v16, %v85
  %v89 = vmul.f32 %v17, %v85
  %v90 = vperm.slane %v11, 1
  %v91 = vperm.slane %v12, 1
  %v92 = vrot.slane %v29, 1
  %v93 = vsel %vm36, %v30, %v92
  %v95 = vmul.f32 %v90, %v93
  %v96 = vmul.f32 %v91, %v93
  %v97 = vperm.slane %v14, 1
  %v98 = vperm.slane %v15, 1
  %v99 = vrot.slane %v41, 1
  %v100 = vsel %vm36, %v42, %v99
  %v102 = vmul.f32 %v97, %v100
  %v103 = vmul.f32 %v98, %v100
  %v106 = vrot.slane %v102, 7
  %v107 = vrot.slane %v103, 7
  %v112 = vsub.f32 %v86, %v106
  %v113 = vsub.f32 %v87, %v102
  %v114 = vsub.f32 %v88, %v107
  %v115 = vsub.f32 %v89, %v103
  %v120 = vrot.slane %v112, 1
  %v121 = vrot.slane %v113, 1
  %v122 = vrot.slane %v114, 1
  %v123 = vrot.slane %v115, 1
  %v128 = vadd.f32 %v64, %v120
  %v129 = vadd.f32 %v65, %v121
  %v130 = vadd.f32 %v66, %v122
  %v131 = vadd.f32 %v67, %v123
  %v134 = vrot.slane %v95, 7
  %v135 = vrot.slane %v96, 7
  %v140 = vadd.f32 %v86, %v134
  %v141 = vadd.f32 %v87, %v95
  %v142 = vadd.f32 %v88, %v135
  %v143 = vadd.f32 %v89, %v96
  %v148 = vrot.slane %v140, 1
  %v149 = vrot.slane %v141, 1
  %v150 = vrot.slane %v142, 1
  %v151 = vrot.slane %v143, 1
  %v156 = vadd.f32 %v80, %v148
  %v157 = vadd.f32 %v81, %v149
  %v158 = vadd.f32 %v82, %v150
  %v159 = vadd.f32 %v83, %v151
  %v164 = vrot.slane %v129, 7
  %v165 = vsel %vm36, %v164, %v128
  %v166 = vrot.slane %v131, 7
  %v167 = vsel %vm36, %v166, %v130
  %170 = vst [vmem:[%s2] sm:$0x3] %v165
  %171 = vst [vmem:[%s2 + $0x2] sm:$0x3] %v167
  %v176 = vrot.slane %v157, 7
  %v177 = vsel %vm36, %v176, %v156
  %v178 = vrot.slane %v159, 7
  %v179 = vsel %vm36, %v178, %v158
  %s182 = scalar_lea.vmem %s2, 4
  %183 = vst [vmem:[%s182] sm:$0x3] %v177
  %184 = vst [vmem:[%s182 + $0x2] sm:$0x3] %v179
  // Predicated region
  $region10: #{fourier_layer_forward.1} parent=0 // pred_check
    _
  $region11: #{fourier_layer_forward.1} parent=0 // pred_check_branch
    %186 = sbr.rel (0) target = $region13
  $region12: #{fourier_layer_forward.1} parent=0 // pred_region
    _
  $region13: #{fourier_layer_forward.1} parent=0 // pred_fallthru
    _
  // Predicated region
  $region14: #{fourier_layer_forward.1} parent=0 // pred_check
    _
  $region15: #{fourier_layer_forward.1} parent=0 // pred_check_branch
    %188 = sbr.rel (0) target = $region17
  $region16: #{fourier_layer_forward.1} parent=0 // pred_region
    _
  $region17: #{fourier_layer_forward.1} parent=0 // pred_fallthru
    _

</llo_original>
